<compile_context>
chip_gen: v5e
topology: v5e:2x2
jax: 0.10.0
libtpu: 0.0.40
codegen_flags: <defaults>
</compile_context>

<pallas_src>
import jax
import jax.numpy as jnp
from jax.experimental import pallas as pl
from jax.experimental.pallas import tpu as pltpu


_LANE = 128                    # lane width (last-dim tiling)
_SUBLANE = 8                   # sublane width (second-to-last-dim tiling)
_MAX_ROW_TILE = 512            # node-row tile cap for the aggregation
_SMALL_GRAPH_ROWS = 256        # fold batches until ~this many rows per step
_VMEM_LIMIT = 48 * 1024 * 1024 # > v5e/v6e scoped defaults, < v7x physical 64MiB


def _round_up(x, m):
    return (x + m - 1) // m * m


# ---------------------------------------------------------------------------
# Stage 1: h = feat @ W      (plain lane-dense GEMM on the MXU)
# ---------------------------------------------------------------------------
def _linear_kernel(x_ref, w_ref, h_ref):
    # x_ref: (TB, TN, in_p), w_ref: (in_p, out_p), h_ref: (TB, TN, out_p)
    tb, tn, in_p = x_ref.shape
    x = x_ref[...].reshape(tb * tn, in_p)           # collapse (TB,TN) -> rows
    h = jnp.dot(x, w_ref[...], preferred_element_type=jnp.float32)
    h_ref[...] = h.reshape(tb, tn, -1).astype(h_ref.dtype)


# ---------------------------------------------------------------------------
# Stage 2: out = relu(adj @ h + bias)   (row-tiled batched matmul on the MXU)
# ---------------------------------------------------------------------------
def _agg_kernel(adj_ref, h_ref, b_ref, out_ref):
    # adj_ref: (TB, TN, N_p), h_ref: (TB, N_p, out_p), b_ref: (1, out_p)
    agg = jnp.einsum("bij,bjk->bik", adj_ref[...], h_ref[...],
                     preferred_element_type=jnp.float32)
    out = jnp.maximum(agg + b_ref[...], 0.0)        # bias + ReLU on the VPU
    out_ref[...] = out.astype(out_ref.dtype)


def gcn_layer(feat, adj, weight, bias):
    """feat: (B, N, in_ft), adj: (B, N, N), weight: (in_ft, out_ft) (i.e. the
    PyTorch nn.Linear weight transposed), bias: (out_ft,) or None.
    Returns relu(adj @ (feat @ weight) + bias) of shape (B, N, out_ft)."""
    B, N, in_ft = feat.shape
    out_ft = weight.shape[1]
    dtype = feat.dtype
    itemsize = jnp.dtype(dtype).itemsize

    if bias is None:
        bias = jnp.zeros((out_ft,), dtype=dtype)

    # ---- padded, lane-dense shapes ----
    in_p = _round_up(in_ft, _LANE)
    out_p = _round_up(out_ft, _LANE)
    tn = min(_MAX_ROW_TILE, _round_up(N, _SUBLANE))   # node-row tile
    n_p = _round_up(N, tn)                            # padded node count
    n_row_tiles = n_p // tn
    # Fold several small graphs per grid step (amortize per-step overhead).
    tb = max(1, min(B, _SMALL_GRAPH_ROWS // n_p)) if n_p < _SMALL_GRAPH_ROWS else 1
    b_p = _round_up(B, tb)                            # padded batch

    feat_p = jnp.pad(feat, ((0, b_p - B), (0, n_p - N), (0, in_p - in_ft)))
    adj_p = jnp.pad(adj, ((0, b_p - B), (0, n_p - N), (0, n_p - N)))
    w_p = jnp.pad(weight.astype(dtype), ((0, in_p - in_ft), (0, out_p - out_ft)))
    bias_p = jnp.pad(bias.astype(dtype), (0, out_p - out_ft)).reshape(1, out_p)

    grid = (b_p // tb, n_row_tiles)
    cparams = pltpu.CompilerParams(
        dimension_semantics=("parallel", "parallel"),
        vmem_limit_bytes=_VMEM_LIMIT)

    # ---- stage 1: h = feat @ W ----
    lin_cost = pl.CostEstimate(
        flops=2 * b_p * n_p * in_p * out_p,
        transcendentals=0,
        bytes_accessed=(feat_p.size + w_p.size + b_p * n_p * out_p) * itemsize)
    h = pl.pallas_call(
        _linear_kernel,
        out_shape=jax.ShapeDtypeStruct((b_p, n_p, out_p), dtype),
        grid_spec=pltpu.PrefetchScalarGridSpec(
            num_scalar_prefetch=0,
            grid=grid,
            in_specs=[
                pl.BlockSpec((tb, tn, in_p), lambda b, r: (b, r, 0)),
                # constant index map -> weight stays VMEM-resident across steps
                pl.BlockSpec((in_p, out_p), lambda b, r: (0, 0)),
            ],
            out_specs=pl.BlockSpec((tb, tn, out_p), lambda b, r: (b, r, 0)),
        ),
        compiler_params=cparams,
        cost_estimate=lin_cost,
    )(feat_p, w_p)

    # ---- stage 2: out = relu(adj @ h + bias) ----
    agg_cost = pl.CostEstimate(
        flops=2 * b_p * n_p * n_p * out_p,
        transcendentals=0,
        bytes_accessed=(adj_p.size + h.size + b_p * n_p * out_p) * itemsize)
    out = pl.pallas_call(
        _agg_kernel,
        out_shape=jax.ShapeDtypeStruct((b_p, n_p, out_p), dtype),
        grid_spec=pltpu.PrefetchScalarGridSpec(
            num_scalar_prefetch=0,
            grid=grid,
            in_specs=[
                pl.BlockSpec((tb, tn, n_p), lambda b, r: (b, r, 0)),
                # h indexed by batch only -> resident across the row-tile axis
                pl.BlockSpec((tb, n_p, out_p), lambda b, r: (b, 0, 0)),
                pl.BlockSpec((1, out_p), lambda b, r: (0, 0)),
            ],
            out_specs=pl.BlockSpec((tb, tn, out_p), lambda b, r: (b, r, 0)),
        ),
        compiler_params=cparams,
        cost_estimate=agg_cost,
    )(adj_p, h, bias_p)

    return out[:B, :N, :out_ft]


def gcn_ref(feat, adj, weight, bias):
    h = jnp.einsum("bnf,fo->bno", feat, weight)
    out = jnp.einsum("bnm,bmo->bno", adj, h)
    if bias is not None:
        out = out + bias
    return jnp.maximum(out, 0.0)


if __name__ == "__main__":
    key = jax.random.PRNGKey(0)
    B, N, in_ft, out_ft = 2, 16, 32, 32

    k_feat, k_adj, k_w = jax.random.split(key, 3)
    feat = jax.random.normal(k_feat, (B, N, in_ft), dtype=jnp.float32)
    adj = jax.random.uniform(k_adj, (B, N, N), dtype=jnp.float32)

    # Xavier-uniform init of nn.Linear(in_ft, out_ft).weight, stored transposed
    # as (in_ft, out_ft); bias initialized to 0.0 as in the module.
    bound = (6.0 / (in_ft + out_ft)) ** 0.5
    weight = jax.random.uniform(
        k_w, (in_ft, out_ft), dtype=jnp.float32, minval=-bound, maxval=bound)
    bias = jnp.zeros((out_ft,), dtype=jnp.float32)

    out = gcn_layer(feat, adj, weight, bias)
    out = jax.block_until_ready(out)

    ref = gcn_ref(feat, adj, weight, bias)
    assert out.shape == (B, N, out_ft)
    assert jnp.allclose(out, ref, atol=1e-5, rtol=1e-5)

    print("KERNEL_OK")
</pallas_src>

<mosaic_0001>
module attributes {stable_mosaic.version = 11 : i64} {
  func.func @_linear_kernel(%arg0: i32, %arg1: i32, %arg2: memref<2x16x128xf32, #tpu.memory_space<vmem>>, %arg3: memref<128x128xf32, #tpu.memory_space<vmem>>, %arg4: memref<2x16x128xf32, #tpu.memory_space<vmem>>) attributes {dimension_semantics = [#tpu.dimension_semantics<parallel>, #tpu.dimension_semantics<parallel>], iteration_bounds = array<i64: 1, 1>, scalar_prefetch = 0 : i64, scratch_operands = 0 : i64, tpu.core_type = #tpu.core_type<tc>, window_params = [{transform_indices = @transform_0, window_bounds = array<i64: 2, 16, 128>}, {pipeline_mode = #tpu.pipeline_mode<synchronous>, transform_indices = @transform_1, window_bounds = array<i64: 128, 128>}, {transform_indices = @transform_2, window_bounds = array<i64: 2, 16, 128>}]} {
    %c0 = arith.constant 0 : index
    %c0_0 = arith.constant 0 : index
    %c0_1 = arith.constant 0 : index
    %0 = vector.load %arg2[%c0, %c0_0, %c0_1] : memref<2x16x128xf32, #tpu.memory_space<vmem>>, vector<2x16x128xf32>
    %1 = vector.shape_cast %0 : vector<2x16x128xf32> to vector<32x128xf32>
    %c0_2 = arith.constant 0 : index
    %c0_3 = arith.constant 0 : index
    %2 = vector.load %arg3[%c0_2, %c0_3] : memref<128x128xf32, #tpu.memory_space<vmem>>, vector<128x128xf32>
    %cst = arith.constant dense<0.000000e+00> : vector<32x128xf32>
    %3 = tpu.matmul %1, %2, %cst {dimension_numbers = #tpu.dot_dimension_numbers<[1], [0], [0], [1], [0, 0, 1, 1], [], []>} : vector<32x128xf32>, vector<128x128xf32>, vector<32x128xf32> -> vector<32x128xf32>
    %4 = vector.shape_cast %3 : vector<32x128xf32> to vector<2x16x128xf32>
    %c0_4 = arith.constant 0 : index
    %c0_5 = arith.constant 0 : index
    %c0_6 = arith.constant 0 : index
    %5 = vector.load %arg4[%c0_4, %c0_5, %c0_6] : memref<2x16x128xf32, #tpu.memory_space<vmem>>, vector<2x16x128xf32>
    tpu.vector_store %arg4[%c0_4, %c0_5, %c0_6], %4 {strides = array<i32>} : memref<2x16x128xf32, #tpu.memory_space<vmem>>, vector<2x16x128xf32>,
    return
  }
  func.func @transform_0(%arg0: i32, %arg1: i32) -> (i32, i32, i32) {
    %c0_i32 = arith.constant 0 : i32
    %c0_i32_0 = arith.constant 0 : i32
    return %arg0, %arg1, %c0_i32 : i32, i32, i32
  }
  func.func @transform_1(%arg0: i32, %arg1: i32) -> (i32, i32) {
    %c0_i32 = arith.constant 0 : i32
    %c0_i32_0 = arith.constant 0 : i32
    %c0_i32_1 = arith.constant 0 : i32
    return %c0_i32, %c0_i32_0 : i32, i32
  }
  func.func @transform_2(%arg0: i32, %arg1: i32) -> (i32, i32, i32) {
    %c0_i32 = arith.constant 0 : i32
    %c0_i32_0 = arith.constant 0 : i32
    return %arg0, %arg1, %c0_i32 : i32, i32, i32
  }
}

</mosaic_0001>

<llo_original>
// kernel: tpu_custom_call.1
$region0: #{tpu_custom_call.1}
  #allocation0 [shape = 'u32[]', space=smem, size = 0x4, offset = 0x4, fixed_abs, tag = 'smem constant byte address 0x4 - core index']
  #allocation1 [shape = 'u32[72,128]{1,0:T(1,128)}', space=vmem, size = 0x9000, scoped, tag = 'internal scratch']
  %s0 = inlined_call_operand.hbm [shape: f32[2,16,128], index: 0, kind: input, shape index: {}]
  %s1 = inlined_call_operand.hbm [shape: f32[128,128], index: 1, kind: input, shape index: {}]
  %s2 = inlined_call_operand.hbm [shape: f32[2,16,128], index: 2, kind: output, shape index: {}]
  %s3 = sld [smem:[#allocation0]]
  $region26: #{tpu_custom_call.1} parent=0
    _
  %s5 = ssub.s32 1, %s3
  %s6 = scalar_select 0, %s5, %s3
  $region1: #{tpu_custom_call.1} parent=0
    #allocation2 [shape = 'u8[16384]{0}', space=vmem, size = 0x4000, scoped, tag = 'input window, operand 0, single buffered']
    #allocation3 [shape = 's32[1]{0}', space=sflag, size = 0x4, scoped, tag = 'scoped memory for tpu_custom_call.1']
    #allocation4 [shape = 's32[1]{0}', space=sflag, size = 0x4, scoped, tag = 'scoped memory for tpu_custom_call.1']
    #allocation5 [shape = 'u8[65536]{0}', space=vmem, size = 0x10000, scoped, tag = 'input window, operand 1, single buffered']
    #allocation6 [shape = 's32[1]{0}', space=sflag, size = 0x4, scoped, tag = 'scoped memory for tpu_custom_call.1']
    #allocation7 [shape = 'u8[16384]{0}', space=vmem, size = 0x4000, scoped, tag = 'output window, operand 0, single buffered']
    %7 = vsyncpa [#allocation3], 0
    %8 = vsyncpa [#allocation6], 0
    %9 = vsyncpa [#allocation4], 0
    // Predicated region
    $region2: #{tpu_custom_call.1} parent=1 // pred_check
      _
    $region3: #{tpu_custom_call.1} parent=1 // pred_check_branch
      %11 = sbr.rel (0) target = $region5
    $region4: #{tpu_custom_call.1} parent=1 // pred_region
      %13 = vsyncadd [#allocation3], 0
      %s14 = sshll.u32 %s0, 4
      %s15 = int_to_ptr.hbm [resolvable:$true] %s14
      %s16 = sshll.u32 [#allocation2], 4
      %s17 = int_to_ptr.vmem [resolvable:$true] %s16
      %22 = dma.hbm_to_vmem [thread:$0]  %s15, 512, %s17, [#allocation3], 128, 128, 8
    $region5: #{tpu_custom_call.1} parent=1 // pred_fallthru
      _
    // Predicated region
    $region6: #{tpu_custom_call.1} parent=1 // pred_check
      _
    $region7: #{tpu_custom_call.1} parent=1 // pred_check_branch
      %24 = sbr.rel (0) target = $region9
    $region8: #{tpu_custom_call.1} parent=1 // pred_region
      %26 = vsyncadd [#allocation6], 0
      %s27 = sshll.u32 %s1, 4
      %s28 = int_to_ptr.hbm [resolvable:$true] %s27
      %s29 = sshll.u32 [#allocation5], 4
      %s30 = int_to_ptr.vmem [resolvable:$true] %s29
      %35 = dma.hbm_to_vmem [thread:$0]  %s28, 2048, %s30, [#allocation6], 128, 128, 8
    $region9: #{tpu_custom_call.1} parent=1 // pred_fallthru
      _
    // Predicated region
    $region10: #{tpu_custom_call.1} parent=1 // pred_check
      _
    $region11: #{tpu_custom_call.1} parent=1 // pred_check_branch
      %37 = sbr.rel (0) target = $region13
    $region12: #{tpu_custom_call.1} parent=1 // pred_region
      %39 = dma.done [#allocation3], 512
    $region13: #{tpu_custom_call.1} parent=1 // pred_fallthru
      _
    // Predicated region
    $region14: #{tpu_custom_call.1} parent=1 // pred_check
      _
    $region15: #{tpu_custom_call.1} parent=1 // pred_check_branch
      %41 = sbr.rel (0) target = $region17
    $region16: #{tpu_custom_call.1} parent=1 // pred_region
      %43 = dma.done [#allocation6], 2048
    $region17: #{tpu_custom_call.1} parent=1 // pred_fallthru
      _
    %v44 = vld [vmem:[#allocation2] sm:$0xff]
    %v45 = vld [vmem:[#allocation2 + $0x8] sm:$0xff]
    %v46 = vld [vmem:[#allocation2 + $0x10] sm:$0xff]
    %v47 = vld [vmem:[#allocation2 + $0x18] sm:$0xff]
    %v48 = vld [vmem:[#allocation5] sm:$0xff]
    %v49 = vld [vmem:[#allocation5 + $0x8] sm:$0xff]
    %v50 = vld [vmem:[#allocation5 + $0x10] sm:$0xff]
    %v51 = vld [vmem:[#allocation5 + $0x18] sm:$0xff]
    %v52 = vld [vmem:[#allocation5 + $0x20] sm:$0xff]
    %v53 = vld [vmem:[#allocation5 + $0x28] sm:$0xff]
    %v54 = vld [vmem:[#allocation5 + $0x30] sm:$0xff]
    %v55 = vld [vmem:[#allocation5 + $0x38] sm:$0xff]
    %v56 = vld [vmem:[#allocation5 + $0x40] sm:$0xff]
    %v57 = vld [vmem:[#allocation5 + $0x48] sm:$0xff]
    %v58 = vld [vmem:[#allocation5 + $0x50] sm:$0xff]
    %v59 = vld [vmem:[#allocation5 + $0x58] sm:$0xff]
    %v60 = vld [vmem:[#allocation5 + $0x60] sm:$0xff]
    %v61 = vld [vmem:[#allocation5 + $0x68] sm:$0xff]
    %v62 = vld [vmem:[#allocation5 + $0x70] sm:$0xff]
    %v63 = vld [vmem:[#allocation5 + $0x78] sm:$0xff]
    %64 = vmatpush.msra.mxu0 %v63
    %65 = vmatpush.msra.mxu0 %v62
    %66 = vmatpush.msra.mxu0 %v61
    %67 = vmatpush.msra.mxu0 %v60
    %68 = vmatpush.msra.mxu0 %v59
    %69 = vmatpush.msra.mxu0 %v58
    %70 = vmatpush.msra.mxu0 %v57
    %71 = vmatpush.msra.mxu0 %v56
    %72 = vmatpush.msra.mxu0 %v55
    %73 = vmatpush.msra.mxu0 %v54
    %74 = vmatpush.msra.mxu0 %v53
    %75 = vmatpush.msra.mxu0 %v52
    %76 = vmatpush.msra.mxu0 %v51
    %77 = vmatpush.msra.mxu0 %v50
    %78 = vmatpush.msra.mxu0 %v49
    %79 = vmatpush.msra.mxu0 %v48
    %80 = vmatmul.f32.gmra.mxu0 %v44
    %v81 = vpop.f32.mrf.mxu0
    %v82 = vadd.f32 0.0, %v81
    %83 = vmatmul.f32.gmra.mxu0 %v45
    %v84 = vpop.f32.mrf.mxu0
    %v85 = vadd.f32 0.0, %v84
    %86 = vmatmul.f32.gmra.mxu0 %v46
    %v87 = vpop.f32.mrf.mxu0
    %v88 = vadd.f32 0.0, %v87
    %89 = vmatmul.f32.gmra.mxu0 %v47
    %v90 = vpop.f32.mrf.mxu0
    %v91 = vadd.f32 0.0, %v90
    %92 = vdwg.mxu0
    %93 = vst [vmem:[#allocation7] sm:$0xff] %v82
    %94 = vst [vmem:[#allocation7 + $0x8] sm:$0xff] %v85
    %95 = vst [vmem:[#allocation7 + $0x10] sm:$0xff] %v88
    %96 = vst [vmem:[#allocation7 + $0x18] sm:$0xff] %v91
    // Predicated region
    $region18: #{tpu_custom_call.1} parent=1 // pred_check
      _
    $region19: #{tpu_custom_call.1} parent=1 // pred_check_branch
      %98 = sbr.rel (0) target = $region21
    $region20: #{tpu_custom_call.1} parent=1 // pred_region
      %100 = vsyncadd [#allocation4], 0
      %s101 = sshll.u32 [#allocation7], 4
      %s102 = int_to_ptr.vmem [resolvable:$true] %s101
      %s103 = sshll.u32 %s2, 4
      %s104 = int_to_ptr.hbm [resolvable:$true] %s103
      %109 = dma.vmem_to_hbm [thread:$0]  %s102, 512, %s104, [#allocation4], 128, 128, 8
    $region21: #{tpu_custom_call.1} parent=1 // pred_fallthru
      _
    // Predicated region
    $region22: #{tpu_custom_call.1} parent=1 // pred_check
      _
    $region23: #{tpu_custom_call.1} parent=1 // pred_check_branch
      %111 = sbr.rel (0) target = $region25
    $region24: #{tpu_custom_call.1} parent=1 // pred_region
      %113 = dma.done [#allocation4], 512
    $region25: #{tpu_custom_call.1} parent=1 // pred_fallthru
      _
    %114 = vsyncpa [#allocation3], 1
    %115 = vsyncpa [#allocation6], 1
    %116 = vsyncpa [#allocation4], 1

</llo_original>
